<compile_context>
chip_gen: v7x
topology: tpu7x:2x2x1
jax: 0.10.0
libtpu: 0.0.40
codegen_flags: <defaults>
</compile_context>

<pallas_src>
import functools

import jax
import jax.numpy as jnp
from jax.experimental import pallas as pl
from jax.experimental.pallas import tpu as pltpu


def _round_up(x, m):
    return (x + m - 1) // m * m


def _pad_to(x, shape):
    pads = [(0, s - d) for d, s in zip(x.shape, shape)]
    if all(p == (0, 0) for p in pads):
        return x
    return jnp.pad(x, pads)


def _sublane(dtype):
    # Minimum sublane multiple: bf16 packs two rows per sublane.
    return 16 if jnp.dtype(dtype).itemsize == 2 else 8


def ablate_cross_kernel(prot_ref, dna_ref,
                        wp_ref, bp_ref, wd_ref, bd_ref,
                        w1p_ref, w1d_ref, b1_ref, w2_ref, b2_ref,
                        w3_ref, b3_ref,
                        out_ref,
                        psum_ref, dsum_ref,
                        *, inv_lp, inv_ld, nt_p, nt_d, nt_total):
    """Streaming mean-pool over L, then projection + MLP at the last step."""
    t = pl.program_id(1)

    @pl.when(t == 0)
    def _():
        psum_ref[...] = jnp.zeros_like(psum_ref)
        dsum_ref[...] = jnp.zeros_like(dsum_ref)

    # Mean-pool hoisted before the projection; accumulate sequence sums in f32.
    def accum_prot():
        psum_ref[...] += jnp.sum(prot_ref[...].astype(jnp.float32), axis=1)

    def accum_dna():
        dsum_ref[...] += jnp.sum(dna_ref[...].astype(jnp.float32), axis=1)

    # The shorter modality's stream is exhausted after nt_mod steps; its
    # index_map is clamped (no extra HBM traffic) and the add is skipped.
    if nt_p == nt_total:
        accum_prot()
    else:
        pl.when(t < nt_p)(accum_prot)
    if nt_d == nt_total:
        accum_dna()
    else:
        pl.when(t < nt_d)(accum_dna)

    @pl.when(t == nt_total - 1)
    def _():
        # Finalize means with compile-time 1/L scales (applied exactly once).
        p = psum_ref[...] * inv_lp                           # (TB, Dp)
        d = dsum_ref[...] * inv_ld                           # (TB, Dd)

        # reshape_prot / reshape_dna on the pooled embeddings.
        pe = jnp.dot(p, wp_ref[...],
                     preferred_element_type=jnp.float32) + bp_ref[...]
        de = jnp.dot(d, wd_ref[...],
                     preferred_element_type=jnp.float32) + bd_ref[...]

        # cat((pe, de), 1) @ w1 == pe @ w1[:E] + de @ w1[E:]  (concat removed)
        h1 = jnp.maximum(
            jnp.dot(pe, w1p_ref[...], preferred_element_type=jnp.float32)
            + jnp.dot(de, w1d_ref[...], preferred_element_type=jnp.float32)
            + b1_ref[...], 0.0)
        h2 = jnp.maximum(
            jnp.dot(h1, w2_ref[...], preferred_element_type=jnp.float32)
            + b2_ref[...], 0.0)
        out_ref[...] = (jnp.dot(h2, w3_ref[...],
                                preferred_element_type=jnp.float32)
                        + b3_ref[...]).astype(out_ref.dtype)


def ablate_cross_forward(prot_emb, dna_emb, params, *,
                         tile_b=128, tile_l=512,
                         vmem_budget_bytes=40 << 20):
    B, Lp, Dp = prot_emb.shape
    _, Ld, Dd = dna_emb.shape
    E = params["wp"].shape[1]
    H1 = params["w1"].shape[1]
    H2 = params["w2"].shape[1]
    OUT = params["w3"].shape[1]

    # --- weights: split w1 (removes concat), lane-dense padded classifier ---
    w1p, w1d = params["w1"][:E, :], params["w1"][E:, :]
    OUT_PAD = _round_up(OUT, 128)
    w3p = _pad_to(params["w3"], (H2, OUT_PAD))
    b3p = _pad_to(params["b3"], (1, OUT_PAD))
    weights = (params["wp"], params["bp"], params["wd"], params["bd"],
               w1p, w1d, params["b1"], params["w2"], params["b2"], w3p, b3p)
    # TODO(synk): at production wp/wd sizes, add pipeline_mode=pl.Buffered(1)
    # to the weight BlockSpecs (after verifying the lowering supports it) so
    # resident weights are single-buffered; pessimistically count 2x here.
    weight_bytes = 2 * sum(int(w.size) * w.dtype.itemsize for w in weights)

    # --- batch tiling: sublane-aligned; >=2 tiles when batch allows so v7x's
    #     second TensorCore gets work on the "parallel" grid axis -------------
    sub_b = 8
    nb_target = 2 if B > sub_b else 1
    tile_b = max(sub_b, min(_round_up(tile_b, sub_b),
                            _round_up(pl.cdiv(B, nb_target), sub_b)))

    # --- per-modality sequence tiles (dtype-aware sublane rounding: bf16=16) -
    sub_p, sub_d = _sublane(prot_emb.dtype), _sublane(dna_emb.dtype)
    bytes_p, bytes_d = prot_emb.dtype.itemsize, dna_emb.dtype.itemsize
    tl_p = min(_round_up(tile_l, sub_p), _round_up(Lp, sub_p))
    tl_d = min(_round_up(tile_l, sub_d), _round_up(Ld, sub_d))

    # --- shrink tiles until the double-buffered working set fits the budget --
    def working_set(tb, tp, td):
        stream = 2 * tb * (tp * Dp * bytes_p + td * Dd * bytes_d)  # 2x: pipeline
        out = 2 * tb * OUT_PAD * 4
        scratch = tb * (Dp + Dd) * 4
        return stream + weight_bytes + out + scratch

    while working_set(tile_b, tl_p, tl_d) > vmem_budget_bytes:
        shrinkable = []
        if tl_p > sub_p:
            shrinkable.append(("p", tl_p * Dp * bytes_p))
        if tl_d > sub_d:
            shrinkable.append(("d", tl_d * Dd * bytes_d))
        if shrinkable:
            which = max(shrinkable, key=lambda c: c[1])[0]
            if which == "p":
                tl_p = _round_up(max(tl_p // 2, sub_p), sub_p)
            else:
                tl_d = _round_up(max(tl_d // 2, sub_d), sub_d)
        elif tile_b > sub_b:
            tile_b = _round_up(max(tile_b // 2, sub_b), sub_b)
        else:
            break

    BP = _round_up(B, tile_b)
    nt_p, nt_d = pl.cdiv(Lp, tl_p), pl.cdiv(Ld, tl_d)
    NT = max(nt_p, nt_d)
    # Zero-padding adds 0 to the sums; the mean uses the true 1/Lp, 1/Ld.
    prot_p = _pad_to(prot_emb, (BP, nt_p * tl_p, Dp))
    dna_p = _pad_to(dna_emb, (BP, nt_d * tl_d, Dd))

    # Clamp the shorter modality's index_map to its own last tile: Pallas does
    # not re-DMA an unchanged block index, so no over-read past nt_mod tiles.
    prot_imap = ((lambda b, t: (b, t, 0)) if nt_p == NT
                 else (lambda b, t: (b, jnp.minimum(t, nt_p - 1), 0)))
    dna_imap = ((lambda b, t: (b, t, 0)) if nt_d == NT
                else (lambda b, t: (b, jnp.minimum(t, nt_d - 1), 0)))

    weight_specs = [pl.BlockSpec(w.shape, lambda b, t: (0, 0)) for w in weights]

    ws = working_set(tile_b, tl_p, tl_d)
    # Explicit scoped-VMEM limit (v5e default 16 MiB would reject large tiles;
    # cap at 64 MiB so a v6e-sized choice never overshoots v7x physical VMEM).
    vmem_limit = int(min(64 << 20, max(32 << 20, ws * 5 // 4 + (2 << 20))))

    bytes_accessed = int(prot_p.size * bytes_p + dna_p.size * bytes_d
                         + weight_bytes // 2 + BP * OUT_PAD * 4)
    flops = int(BP * (nt_p * tl_p * Dp + nt_d * tl_d * Dd)        # streaming adds
                + 2 * BP * (Dp * E + Dd * E + 2 * E * H1
                            + H1 * H2 + H2 * OUT_PAD))            # finalize MLP

    kernel = functools.partial(ablate_cross_kernel,
                               inv_lp=1.0 / Lp, inv_ld=1.0 / Ld,
                               nt_p=nt_p, nt_d=nt_d, nt_total=NT)

    out = pl.pallas_call(
        kernel,
        out_shape=jax.ShapeDtypeStruct((BP, OUT_PAD), jnp.float32),
        grid_spec=pltpu.PrefetchScalarGridSpec(
            num_scalar_prefetch=0,
            grid=(BP // tile_b, NT),
            in_specs=[
                pl.BlockSpec((tile_b, tl_p, Dp), prot_imap),
                pl.BlockSpec((tile_b, tl_d, Dd), dna_imap),
                *weight_specs,
            ],
            out_specs=pl.BlockSpec((tile_b, OUT_PAD), lambda b, t: (b, 0)),
            scratch_shapes=[pltpu.VMEM((tile_b, Dp), jnp.float32),
                            pltpu.VMEM((tile_b, Dd), jnp.float32)]),
        compiler_params=pltpu.CompilerParams(
            dimension_semantics=("parallel", "arbitrary"),
            vmem_limit_bytes=vmem_limit),
        cost_estimate=pl.CostEstimate(flops=flops, transcendentals=0,
                                      bytes_accessed=bytes_accessed),
    )(prot_p, dna_p, *weights)
    return out[:B, :OUT]


def linear_params(key, fan_in, fan_out):
    """Deterministic init matching torch.nn.Linear default (uniform +-1/sqrt(fan_in))."""
    kw, kb = jax.random.split(key)
    bound = 1.0 / (fan_in ** 0.5)
    w = jax.random.uniform(kw, (fan_out, fan_in), jnp.float32, -bound, bound)
    b = jax.random.uniform(kb, (fan_out,), jnp.float32, -bound, bound)
    return w.T, b.reshape(1, fan_out)   # pre-transpose to (in, out)


# ---- mask helpers (plain-JAX glue; semantics match the PyTorch module) ----
def huggingface_attentn_mask(seqs, pad_idx):
    return seqs != pad_idx                              # (B, L) bool


def make_pad_mask(q, k, pad_idx):
    qm = (q != pad_idx)[:, None, :, None]               # (B, 1, Lq, 1)
    km = (k != pad_idx)[:, None, None, :]               # (B, 1, 1, Lk)
    return qm & km                                      # (B, 1, Lq, Lk)


if __name__ == "__main__":
    # Small shapes consistent with the module's forward.
    B, Lp, Ld = 2, 8, 8
    PROT_D, DNA_D, EMB = 32, 48, 32          # prot_demb, dna_demb, d_embedding
    H1, H2, OUT = 32, 16, 4                  # mlp l1/l2/l3 out dims
    PAD_IDX = 0

    key = jax.random.PRNGKey(0)
    ks = jax.random.split(key, 9)

    # The module's true inputs are token-id sequences.
    prot_tok = jax.random.randint(ks[0], (B, Lp), 0, 20, dtype=jnp.int32)
    dna_tok = jax.random.randint(ks[1], (B, Ld), 0, 20, dtype=jnp.int32)

    # Masks: the 2D masks feed the frozen encoders; the 4D pad masks are
    # computed but unused in the reference forward, reproduced here as glue.
    _prot_2dmask = huggingface_attentn_mask(prot_tok, PAD_IDX)
    _dna_2dmask = huggingface_attentn_mask(dna_tok, PAD_IDX)
    _protq_mask = make_pad_mask(prot_tok, dna_tok, PAD_IDX)
    _dnaq_mask = make_pad_mask(dna_tok, prot_tok, PAD_IDX)
    _prot_mask = make_pad_mask(prot_tok, prot_tok, PAD_IDX)
    _dna_mask = make_pad_mask(dna_tok, dna_tok, PAD_IDX)

    # TODO(synk): the frozen pretrained EsmModel / nucleotide-transformer
    # encoders have no Pallas equivalent; their last_hidden_state outputs are
    # synthesized deterministically here and consumed by the kernel.
    prot_emb = jax.random.normal(ks[2], (B, Lp, PROT_D), jnp.float32)
    dna_emb = jax.random.normal(ks[3], (B, Ld, DNA_D), jnp.float32)

    wp, bp = linear_params(ks[4], PROT_D, EMB)
    wd, bd = linear_params(ks[5], DNA_D, EMB)
    w1, b1 = linear_params(ks[6], 2 * EMB, H1)
    w2, b2 = linear_params(ks[7], H1, H2)
    w3, b3 = linear_params(ks[8], H2, OUT)
    params = dict(wp=wp, bp=bp, wd=wd, bd=bd,
                  w1=w1, b1=b1, w2=w2, b2=b2, w3=w3, b3=b3)

    def reference(pe, de):
        p_ref = jnp.mean(jnp.einsum("bld,de->ble", pe, wp) + bp, axis=1)
        d_ref = jnp.mean(jnp.einsum("bld,de->ble", de, wd) + bd, axis=1)
        x_ref = jnp.concatenate([p_ref, d_ref], axis=1)
        h1r = jnp.maximum(x_ref @ w1 + b1, 0.0)
        h2r = jnp.maximum(h1r @ w2 + b2, 0.0)
        return h2r @ w3 + b3

    # 1) f32 streaming, single tile per modality.
    out = jax.block_until_ready(ablate_cross_forward(prot_emb, dna_emb, params))
    ref = reference(prot_emb, dna_emb)
    assert out.shape == (B, OUT)
    assert jnp.allclose(out, ref, atol=1e-4, rtol=1e-4)

    # 2) bf16 streaming (production path; f32 accumulation in-kernel,
    #    16-row sublane rounding). Reference uses identically rounded inputs.
    prot_bf = prot_emb.astype(jnp.bfloat16)
    dna_bf = dna_emb.astype(jnp.bfloat16)
    out_bf = jax.block_until_ready(ablate_cross_forward(prot_bf, dna_bf, params))
    ref_bf = reference(prot_bf.astype(jnp.float32), dna_bf.astype(jnp.float32))
    assert jnp.allclose(out_bf, ref_bf, atol=1e-3, rtol=1e-3)

    # 3) Unequal sequence lengths with a small forced tile so the shorter
    #    modality's clamped index_map + pl.when guard path is exercised.
    Lp2, Ld2 = 40, 16
    prot_emb2 = jax.random.normal(jax.random.PRNGKey(1), (B, Lp2, PROT_D),
                                  jnp.float32)
    dna_emb2 = jax.random.normal(jax.random.PRNGKey(2), (B, Ld2, DNA_D),
                                 jnp.float32)
    out2 = jax.block_until_ready(
        ablate_cross_forward(prot_emb2, dna_emb2, params, tile_l=8))
    ref2 = reference(prot_emb2, dna_emb2)
    assert jnp.allclose(out2, ref2, atol=1e-4, rtol=1e-4)

    print("KERNEL_OK")
</pallas_src>

<mosaic_0001>
module attributes {stable_mosaic.version = 11 : i64} {
  func.func @ablate_cross_kernel(%arg0: i32, %arg1: i32, %arg2: memref<8x8x32xf32, #tpu.memory_space<vmem>>, %arg3: memref<8x8x48xf32, #tpu.memory_space<vmem>>, %arg4: memref<32x32xf32, #tpu.memory_space<vmem>>, %arg5: memref<1x32xf32, #tpu.memory_space<vmem>>, %arg6: memref<48x32xf32, #tpu.memory_space<vmem>>, %arg7: memref<1x32xf32, #tpu.memory_space<vmem>>, %arg8: memref<32x32xf32, #tpu.memory_space<vmem>>, %arg9: memref<32x32xf32, #tpu.memory_space<vmem>>, %arg10: memref<1x32xf32, #tpu.memory_space<vmem>>, %arg11: memref<32x16xf32, #tpu.memory_space<vmem>>, %arg12: memref<1x16xf32, #tpu.memory_space<vmem>>, %arg13: memref<16x128xf32, #tpu.memory_space<vmem>>, %arg14: memref<1x128xf32, #tpu.memory_space<vmem>>, %arg15: memref<8x128xf32, #tpu.memory_space<vmem>>, %arg16: memref<8x32xf32, #tpu.memory_space<vmem>>, %arg17: memref<8x48xf32, #tpu.memory_space<vmem>>) attributes {dimension_semantics = [#tpu.dimension_semantics<parallel>, #tpu.dimension_semantics<arbitrary>], iteration_bounds = array<i64: 1, 1>, scalar_prefetch = 0 : i64, scratch_operands = 2 : i64, tpu.core_type = #tpu.core_type<tc>, window_params = [{transform_indices = @transform_0, window_bounds = array<i64: 8, 8, 32>}, {transform_indices = @transform_1, window_bounds = array<i64: 8, 8, 48>}, {pipeline_mode = #tpu.pipeline_mode<synchronous>, transform_indices = @transform_2, window_bounds = array<i64: 32, 32>}, {pipeline_mode = #tpu.pipeline_mode<synchronous>, transform_indices = @transform_3, window_bounds = array<i64: 1, 32>}, {pipeline_mode = #tpu.pipeline_mode<synchronous>, transform_indices = @transform_4, window_bounds = array<i64: 48, 32>}, {pipeline_mode = #tpu.pipeline_mode<synchronous>, transform_indices = @transform_5, window_bounds = array<i64: 1, 32>}, {pipeline_mode = #tpu.pipeline_mode<synchronous>, transform_indices = @transform_6, window_bounds = array<i64: 32, 32>}, {pipeline_mode = #tpu.pipeline_mode<synchronous>, transform_indices = @transform_7, window_bounds = array<i64: 32, 32>}, {pipeline_mode = #tpu.pipeline_mode<synchronous>, transform_indices = @transform_8, window_bounds = array<i64: 1, 32>}, {pipeline_mode = #tpu.pipeline_mode<synchronous>, transform_indices = @transform_9, window_bounds = array<i64: 32, 16>}, {pipeline_mode = #tpu.pipeline_mode<synchronous>, transform_indices = @transform_10, window_bounds = array<i64: 1, 16>}, {pipeline_mode = #tpu.pipeline_mode<synchronous>, transform_indices = @transform_11, window_bounds = array<i64: 16, 128>}, {pipeline_mode = #tpu.pipeline_mode<synchronous>, transform_indices = @transform_12, window_bounds = array<i64: 1, 128>}, {transform_indices = @transform_13, window_bounds = array<i64: 8, 128>}]} {
    %c0_i32 = arith.constant 0 : i32
    %0 = arith.cmpi eq, %arg1, %c0_i32 : i32
    %1 = arith.extui %0 : i1 to i32
    %c0_i32_0 = arith.constant 0 : i32
    %2 = arith.cmpi ne, %1, %c0_i32_0 : i32
    scf.if %2 {
      %cst_17 = arith.constant 0.000000e+00 : f32
      %16 = vector.broadcast %cst_17 : f32 to vector<8x32xf32>
      %c0_18 = arith.constant 0 : index
      %c0_19 = arith.constant 0 : index
      %17 = vector.load %arg16[%c0_18, %c0_19] : memref<8x32xf32, #tpu.memory_space<vmem>>, vector<8x32xf32>
      tpu.vector_store %arg16[%c0_18, %c0_19], %16 {strides = array<i32>} : memref<8x32xf32, #tpu.memory_space<vmem>>, vector<8x32xf32>,
      %cst_20 = arith.constant 0.000000e+00 : f32
      %18 = vector.broadcast %cst_20 : f32 to vector<8x48xf32>
      %c0_21 = arith.constant 0 : index
      %c0_22 = arith.constant 0 : index
      %19 = vector.load %arg17[%c0_21, %c0_22] : memref<8x48xf32, #tpu.memory_space<vmem>>, vector<8x48xf32>
      tpu.vector_store %arg17[%c0_21, %c0_22], %18 {strides = array<i32>} : memref<8x48xf32, #tpu.memory_space<vmem>>, vector<8x48xf32>,
    } else {
    }
    %c0 = arith.constant 0 : index
    %c0_1 = arith.constant 0 : index
    %3 = vector.load %arg16[%c0, %c0_1] : memref<8x32xf32, #tpu.memory_space<vmem>>, vector<8x32xf32>
    %c0_2 = arith.constant 0 : index
    %c0_3 = arith.constant 0 : index
    %c0_4 = arith.constant 0 : index
    %4 = vector.load %arg2[%c0_2, %c0_3, %c0_4] : memref<8x8x32xf32, #tpu.memory_space<vmem>>, vector<8x8x32xf32>
    %cst = arith.constant dense<0.000000e+00> : vector<8x32xf32>
    %5 = vector.multi_reduction <add>, %4, %cst [1] : vector<8x8x32xf32> to vector<8x32xf32>
    %6 = arith.addf %3, %5 : vector<8x32xf32>
    %c0_5 = arith.constant 0 : index
    %c0_6 = arith.constant 0 : index
    %7 = vector.load %arg16[%c0_5, %c0_6] : memref<8x32xf32, #tpu.memory_space<vmem>>, vector<8x32xf32>
    tpu.vector_store %arg16[%c0_5, %c0_6], %6 {strides = array<i32>} : memref<8x32xf32, #tpu.memory_space<vmem>>, vector<8x32xf32>,
    %c0_7 = arith.constant 0 : index
    %c0_8 = arith.constant 0 : index
    %8 = vector.load %arg17[%c0_7, %c0_8] : memref<8x48xf32, #tpu.memory_space<vmem>>, vector<8x48xf32>
    %c0_9 = arith.constant 0 : index
    %c0_10 = arith.constant 0 : index
    %c0_11 = arith.constant 0 : index
    %9 = vector.load %arg3[%c0_9, %c0_10, %c0_11] : memref<8x8x48xf32, #tpu.memory_space<vmem>>, vector<8x8x48xf32>
    %cst_12 = arith.constant dense<0.000000e+00> : vector<8x48xf32>
    %10 = vector.multi_reduction <add>, %9, %cst_12 [1] : vector<8x8x48xf32> to vector<8x48xf32>
    %11 = arith.addf %8, %10 : vector<8x48xf32>
    %c0_13 = arith.constant 0 : index
    %c0_14 = arith.constant 0 : index
    %12 = vector.load %arg17[%c0_13, %c0_14] : memref<8x48xf32, #tpu.memory_space<vmem>>, vector<8x48xf32>
    tpu.vector_store %arg17[%c0_13, %c0_14], %11 {strides = array<i32>} : memref<8x48xf32, #tpu.memory_space<vmem>>, vector<8x48xf32>,
    %c0_i32_15 = arith.constant 0 : i32
    %13 = arith.cmpi eq, %arg1, %c0_i32_15 : i32
    %14 = arith.extui %13 : i1 to i32
    %c0_i32_16 = arith.constant 0 : i32
    %15 = arith.cmpi ne, %14, %c0_i32_16 : i32
    scf.if %15 {
      %c0_17 = arith.constant 0 : index
      %c0_18 = arith.constant 0 : index
      %16 = vector.load %arg16[%c0_17, %c0_18] : memref<8x32xf32, #tpu.memory_space<vmem>>, vector<8x32xf32>
      %cst_19 = arith.constant 1.250000e-01 : f32
      %17 = vector.broadcast %cst_19 : f32 to vector<8x32xf32>
      %18 = arith.mulf %16, %17 : vector<8x32xf32>
      %c0_20 = arith.constant 0 : index
      %c0_21 = arith.constant 0 : index
      %19 = vector.load %arg17[%c0_20, %c0_21] : memref<8x48xf32, #tpu.memory_space<vmem>>, vector<8x48xf32>
      %cst_22 = arith.constant 1.250000e-01 : f32
      %20 = vector.broadcast %cst_22 : f32 to vector<8x48xf32>
      %21 = arith.mulf %19, %20 : vector<8x48xf32>
      %c0_23 = arith.constant 0 : index
      %c0_24 = arith.constant 0 : index
      %22 = vector.load %arg4[%c0_23, %c0_24] : memref<32x32xf32, #tpu.memory_space<vmem>>, vector<32x32xf32>
      %cst_25 = arith.constant dense<0.000000e+00> : vector<8x32xf32>
      %23 = tpu.matmul %18, %22, %cst_25 {dimension_numbers = #tpu.dot_dimension_numbers<[1], [0], [0], [1], [0, 0, 1, 1], [], []>} : vector<8x32xf32>, vector<32x32xf32>, vector<8x32xf32> -> vector<8x32xf32>
      %c0_26 = arith.constant 0 : index
      %c0_27 = arith.constant 0 : index
      %24 = vector.load %arg5[%c0_26, %c0_27] : memref<1x32xf32, #tpu.memory_space<vmem>>, vector<1x32xf32>
      %25 = vector.broadcast %24 : vector<1x32xf32> to vector<8x32xf32>
      %26 = arith.addf %23, %25 : vector<8x32xf32>
      %c0_28 = arith.constant 0 : index
      %c0_29 = arith.constant 0 : index
      %27 = vector.load %arg6[%c0_28, %c0_29] : memref<48x32xf32, #tpu.memory_space<vmem>>, vector<48x32xf32>
      %cst_30 = arith.constant dense<0.000000e+00> : vector<8x32xf32>
      %28 = tpu.matmul %21, %27, %cst_30 {dimension_numbers = #tpu.dot_dimension_numbers<[1], [0], [0], [1], [0, 0, 1, 1], [], []>} : vector<8x48xf32>, vector<48x32xf32>, vector<8x32xf32> -> vector<8x32xf32>
      %c0_31 = arith.constant 0 : index
      %c0_32 = arith.constant 0 : index
      %29 = vector.load %arg7[%c0_31, %c0_32] : memref<1x32xf32, #tpu.memory_space<vmem>>, vector<1x32xf32>
      %30 = vector.broadcast %29 : vector<1x32xf32> to vector<8x32xf32>
      %31 = arith.addf %28, %30 : vector<8x32xf32>
      %c0_33 = arith.constant 0 : index
      %c0_34 = arith.constant 0 : index
      %32 = vector.load %arg8[%c0_33, %c0_34] : memref<32x32xf32, #tpu.memory_space<vmem>>, vector<32x32xf32>
      %cst_35 = arith.constant dense<0.000000e+00> : vector<8x32xf32>
      %33 = tpu.matmul %26, %32, %cst_35 {dimension_numbers = #tpu.dot_dimension_numbers<[1], [0], [0], [1], [0, 0, 1, 1], [], []>} : vector<8x32xf32>, vector<32x32xf32>, vector<8x32xf32> -> vector<8x32xf32>
      %c0_36 = arith.constant 0 : index
      %c0_37 = arith.constant 0 : index
      %34 = vector.load %arg9[%c0_36, %c0_37] : memref<32x32xf32, #tpu.memory_space<vmem>>, vector<32x32xf32>
      %cst_38 = arith.constant dense<0.000000e+00> : vector<8x32xf32>
      %35 = tpu.matmul %31, %34, %cst_38 {dimension_numbers = #tpu.dot_dimension_numbers<[1], [0], [0], [1], [0, 0, 1, 1], [], []>} : vector<8x32xf32>, vector<32x32xf32>, vector<8x32xf32> -> vector<8x32xf32>
      %36 = arith.addf %33, %35 : vector<8x32xf32>
      %c0_39 = arith.constant 0 : index
      %c0_40 = arith.constant 0 : index
      %37 = vector.load %arg10[%c0_39, %c0_40] : memref<1x32xf32, #tpu.memory_space<vmem>>, vector<1x32xf32>
      %38 = vector.broadcast %37 : vector<1x32xf32> to vector<8x32xf32>
      %39 = arith.addf %36, %38 : vector<8x32xf32>
      %cst_41 = arith.constant 0.000000e+00 : f32
      %40 = vector.broadcast %cst_41 : f32 to vector<8x32xf32>
      %41 = arith.maximumf %39, %40 : vector<8x32xf32>
      %c0_42 = arith.constant 0 : index
      %c0_43 = arith.constant 0 : index
      %42 = vector.load %arg11[%c0_42, %c0_43] : memref<32x16xf32, #tpu.memory_space<vmem>>, vector<32x16xf32>
      %cst_44 = arith.constant dense<0.000000e+00> : vector<8x16xf32>
      %43 = tpu.matmul %41, %42, %cst_44 {dimension_numbers = #tpu.dot_dimension_numbers<[1], [0], [0], [1], [0, 0, 1, 1], [], []>} : vector<8x32xf32>, vector<32x16xf32>, vector<8x16xf32> -> vector<8x16xf32>
      %c0_45 = arith.constant 0 : index
      %c0_46 = arith.constant 0 : index
      %44 = vector.load %arg12[%c0_45, %c0_46] : memref<1x16xf32, #tpu.memory_space<vmem>>, vector<1x16xf32>
      %45 = vector.broadcast %44 : vector<1x16xf32> to vector<8x16xf32>
      %46 = arith.addf %43, %45 : vector<8x16xf32>
      %cst_47 = arith.constant 0.000000e+00 : f32
      %47 = vector.broadcast %cst_47 : f32 to vector<8x16xf32>
      %48 = arith.maximumf %46, %47 : vector<8x16xf32>
      %c0_48 = arith.constant 0 : index
      %c0_49 = arith.constant 0 : index
      %49 = vector.load %arg13[%c0_48, %c0_49] : memref<16x128xf32, #tpu.memory_space<vmem>>, vector<16x128xf32>
      %cst_50 = arith.constant dense<0.000000e+00> : vector<8x128xf32>
      %50 = tpu.matmul %48, %49, %cst_50 {dimension_numbers = #tpu.dot_dimension_numbers<[1], [0], [0], [1], [0, 0, 1, 1], [], []>} : vector<8x16xf32>, vector<16x128xf32>, vector<8x128xf32> -> vector<8x128xf32>
      %c0_51 = arith.constant 0 : index
      %c0_52 = arith.constant 0 : index
      %51 = vector.load %arg14[%c0_51, %c0_52] : memref<1x128xf32, #tpu.memory_space<vmem>>, vector<1x128xf32>
      %52 = vector.broadcast %51 : vector<1x128xf32> to vector<8x128xf32>
      %53 = arith.addf %50, %52 : vector<8x128xf32>
      %c0_53 = arith.constant 0 : index
      %c0_54 = arith.constant 0 : index
      %54 = vector.load %arg15[%c0_53, %c0_54] : memref<8x128xf32, #tpu.memory_space<vmem>>, vector<8x128xf32>
      tpu.vector_store %arg15[%c0_53, %c0_54], %53 {strides = array<i32>} : memref<8x128xf32, #tpu.memory_space<vmem>>, vector<8x128xf32>,
    } else {
    }
    return
  }
  func.func @transform_0(%arg0: i32, %arg1: i32) -> (i32, i32, i32) {
    %c0_i32 = arith.constant 0 : i32
    %c0_i32_0 = arith.constant 0 : i32
    return %arg0, %arg1, %c0_i32 : i32, i32, i32
  }
  func.func @transform_1(%arg0: i32, %arg1: i32) -> (i32, i32, i32) {
    %c0_i32 = arith.constant 0 : i32
    %c0_i32_0 = arith.constant 0 : i32
    return %arg0, %arg1, %c0_i32 : i32, i32, i32
  }
  func.func @transform_2(%arg0: i32, %arg1: i32) -> (i32, i32) {
    %c0_i32 = arith.constant 0 : i32
    %c0_i32_0 = arith.constant 0 : i32
    %c0_i32_1 = arith.constant 0 : i32
    return %c0_i32, %c0_i32_0 : i32, i32
  }
  func.func @transform_3(%arg0: i32, %arg1: i32) -> (i32, i32) {
    %c0_i32 = arith.constant 0 : i32
    %c0_i32_0 = arith.constant 0 : i32
    %c0_i32_1 = arith.constant 0 : i32
    return %c0_i32, %c0_i32_0 : i32, i32
  }
  func.func @transform_4(%arg0: i32, %arg1: i32) -> (i32, i32) {
    %c0_i32 = arith.constant 0 : i32
    %c0_i32_0 = arith.constant 0 : i32
    %c0_i32_1 = arith.constant 0 : i32
    return %c0_i32, %c0_i32_0 : i32, i32
  }
  func.func @transform_5(%arg0: i32, %arg1: i32) -> (i32, i32) {
    %c0_i32 = arith.constant 0 : i32
    %c0_i32_0 = arith.constant 0 : i32
    %c0_i32_1 = arith.constant 0 : i32
    return %c0_i32, %c0_i32_0 : i32, i32
  }
  func.func @transform_6(%arg0: i32, %arg1: i32) -> (i32, i32) {
    %c0_i32 = arith.constant 0 : i32
    %c0_i32_0 = arith.constant 0 : i32
    %c0_i32_1 = arith.constant 0 : i32
    return %c0_i32, %c0_i32_0 : i32, i32
  }
  func.func @transform_7(%arg0: i32, %arg1: i32) -> (i32, i32) {
    %c0_i32 = arith.constant 0 : i32
    %c0_i32_0 = arith.constant 0 : i32
    %c0_i32_1 = arith.constant 0 : i32
    return %c0_i32, %c0_i32_0 : i32, i32
  }
  func.func @transform_8(%arg0: i32, %arg1: i32) -> (i32, i32) {
    %c0_i32 = arith.constant 0 : i32
    %c0_i32_0 = arith.constant 0 : i32
    %c0_i32_1 = arith.constant 0 : i32
    return %c0_i32, %c0_i32_0 : i32, i32
  }
  func.func @transform_9(%arg0: i32, %arg1: i32) -> (i32, i32) {
    %c0_i32 = arith.constant 0 : i32
    %c0_i32_0 = arith.constant 0 : i32
    %c0_i32_1 = arith.constant 0 : i32
    return %c0_i32, %c0_i32_0 : i32, i32
  }
  func.func @transform_10(%arg0: i32, %arg1: i32) -> (i32, i32) {
    %c0_i32 = arith.constant 0 : i32
    %c0_i32_0 = arith.constant 0 : i32
    %c0_i32_1 = arith.constant 0 : i32
    return %c0_i32, %c0_i32_0 : i32, i32
  }
  func.func @transform_11(%arg0: i32, %arg1: i32) -> (i32, i32) {
    %c0_i32 = arith.constant 0 : i32
    %c0_i32_0 = arith.constant 0 : i32
    %c0_i32_1 = arith.constant 0 : i32
    return %c0_i32, %c0_i32_0 : i32, i32
  }
  func.func @transform_12(%arg0: i32, %arg1: i32) -> (i32, i32) {
    %c0_i32 = arith.constant 0 : i32
    %c0_i32_0 = arith.constant 0 : i32
    %c0_i32_1 = arith.constant 0 : i32
    return %c0_i32, %c0_i32_0 : i32, i32
  }
  func.func @transform_13(%arg0: i32, %arg1: i32) -> (i32, i32) {
    %c0_i32 = arith.constant 0 : i32
    %c0_i32_0 = arith.constant 0 : i32
    return %arg0, %c0_i32 : i32, i32
  }
}

</mosaic_0001>

<llo_original>
// kernel: tpu_custom_call.1
$region0: #{tpu_custom_call.1}
  #allocation0 [shape = 'u32[]', space=smem, size = 0x4, offset = 0x4, fixed_abs, tag = 'smem constant byte address 0x4 - core index']
  #allocation1 [shape = 'u32[144,128]{1,0:T(1,128)}', space=vmem, size = 0x12000, scoped, tag = 'internal scratch']
  #allocation2 [shape = 'f32[8,32]{1,0:T(8,128)}', space=vmem, size = 0x1000, scoped, tag = 'scratch operand']
  #allocation3 [shape = 'f32[8,48]{1,0:T(8,128)}', space=vmem, size = 0x1000, scoped, tag = 'scratch operand']
  %s0 = inlined_call_operand.vmem [shape: f32[8,8,32], index: 0, kind: input, shape index: {}]
  %s1 = inlined_call_operand.vmem [shape: f32[8,8,48], index: 1, kind: input, shape index: {}]
  %s2 = inlined_call_operand.hbm [shape: f32[32,32], index: 2, kind: input, shape index: {}]
  %s3 = inlined_call_operand.vmem [shape: f32[1,32], index: 3, kind: input, shape index: {}]
  %s4 = inlined_call_operand.vmem [shape: f32[48,32], index: 4, kind: input, shape index: {}]
  %s5 = inlined_call_operand.vmem [shape: f32[1,32], index: 5, kind: input, shape index: {}]
  %s6 = inlined_call_operand.hbm [shape: f32[32,32], index: 6, kind: input, shape index: {}]
  %s7 = inlined_call_operand.hbm [shape: f32[32,32], index: 7, kind: input, shape index: {}]
  %s8 = inlined_call_operand.hbm [shape: f32[1,32], index: 8, kind: input, shape index: {}]
  %s9 = inlined_call_operand.vmem [shape: f32[32,16], index: 9, kind: input, shape index: {}]
  %s10 = inlined_call_operand.vmem [shape: f32[1,16], index: 10, kind: input, shape index: {}]
  %s11 = inlined_call_operand.vmem [shape: f32[16,128], index: 11, kind: input, shape index: {}]
  %s12 = inlined_call_operand.vmem [shape: f32[1,128], index: 12, kind: input, shape index: {}]
  %s13 = inlined_call_operand.hbm [shape: f32[8,128], index: 13, kind: output, shape index: {}]
  %s14 = sld [smem:[#allocation0]]
  $region86: #{tpu_custom_call.1} parent=0
    _
  %s16 = ssub.s32 1, %s14
  %s17 = scalar_select 0, %s16, %s14
  $region1: #{tpu_custom_call.1} parent=0
    #allocation4 [shape = 'u8[16384]{0}', space=vmem, size = 0x4000, scoped, tag = 'input window, operand 2, single buffered']
    #allocation5 [shape = 's32[1]{0}', space=sflag, size = 0x4, scoped, tag = 'scoped memory for tpu_custom_call.1']
    #allocation6 [shape = 's32[1]{0}', space=sflag, size = 0x4, scoped, tag = 'scoped memory for tpu_custom_call.1']
    #allocation7 [shape = 'u8[16384]{0}', space=vmem, size = 0x4000, scoped, tag = 'input window, operand 6, single buffered']
    #allocation8 [shape = 's32[1]{0}', space=sflag, size = 0x4, scoped, tag = 'scoped memory for tpu_custom_call.1']
    #allocation9 [shape = 'u8[16384]{0}', space=vmem, size = 0x4000, scoped, tag = 'input window, operand 7, single buffered']
    #allocation10 [shape = 'u8[512]{0}', space=vmem, size = 0x400, scoped, tag = 'input window, operand 8, single buffered']
    #allocation11 [shape = 's32[1]{0}', space=sflag, size = 0x4, scoped, tag = 'scoped memory for tpu_custom_call.1']
    #allocation12 [shape = 'u8[4096]{0}', space=vmem, size = 0x1000, scoped, tag = 'output window, operand 0, single buffered']
    %18 = vsyncpa [#allocation5], 0
    %19 = vsyncpa [#allocation8], 0
    %20 = vsyncpa [#allocation11], 0
    %21 = vsyncpa [#allocation6], 0
    // Predicated region
    $region2: #{tpu_custom_call.1} parent=1 // pred_check
      _
    $region3: #{tpu_custom_call.1} parent=1 // pred_check_branch
      %23 = sbr.rel (0) target = $region5
    $region4: #{tpu_custom_call.1} parent=1 // pred_region
      _
    $region5: #{tpu_custom_call.1} parent=1 // pred_fallthru
      _
    // Predicated region
    $region6: #{tpu_custom_call.1} parent=1 // pred_check
      _
    $region7: #{tpu_custom_call.1} parent=1 // pred_check_branch
      %25 = sbr.rel (0) target = $region9
    $region8: #{tpu_custom_call.1} parent=1 // pred_region
      _
    $region9: #{tpu_custom_call.1} parent=1 // pred_fallthru
      _
    // Predicated region
    $region10: #{tpu_custom_call.1} parent=1 // pred_check
      _
    $region11: #{tpu_custom_call.1} parent=1 // pred_check_branch
      %27 = sbr.rel (0) target = $region13
    $region12: #{tpu_custom_call.1} parent=1 // pred_region
      %s29 = ssub.s32 512, 512
      %30 = vsyncadd [#allocation5], %s29
      %s31 = sshll.u32 [#allocation4], 4
      %s32 = int_to_ptr.vmem [resolvable:$true] %s31
      %37 = dma.hbm_to_vmem [thread:$0]  %s2, 512, %s32, [#allocation5], 128, 128, 8
    $region13: #{tpu_custom_call.1} parent=1 // pred_fallthru
      _
    // Predicated region
    $region14: #{tpu_custom_call.1} parent=1 // pred_check
      _
    $region15: #{tpu_custom_call.1} parent=1 // pred_check_branch
      %39 = sbr.rel (0) target = $region17
    $region16: #{tpu_custom_call.1} parent=1 // pred_region
      _
    $region17: #{tpu_custom_call.1} parent=1 // pred_fallthru
      _
    // Predicated region
    $region18: #{tpu_custom_call.1} parent=1 // pred_check
      _
    $region19: #{tpu_custom_call.1} parent=1 // pred_check_branch
      %41 = sbr.rel (0) target = $region21
    $region20: #{tpu_custom_call.1} parent=1 // pred_region
      _
    $region21: #{tpu_custom_call.1} parent=1 // pred_fallthru
      _
    // Predicated region
    $region22: #{tpu_custom_call.1} parent=1 // pred_check
      _
    $region23: #{tpu_custom_call.1} parent=1 // pred_check_branch
      %43 = sbr.rel (0) target = $region25
    $region24: #{tpu_custom_call.1} parent=1 // pred_region
      _
    $region25: #{tpu_custom_call.1} parent=1 // pred_fallthru
      _
    // Predicated region
    $region26: #{tpu_custom_call.1} parent=1 // pred_check
      _
    $region27: #{tpu_custom_call.1} parent=1 // pred_check_branch
      %45 = sbr.rel (0) target = $region29
    $region28: #{tpu_custom_call.1} parent=1 // pred_region
      %s47 = ssub.s32 512, 512
      %48 = vsyncadd [#allocation8], %s47
      %s49 = sshll.u32 [#allocation7], 4
      %s50 = int_to_ptr.vmem [resolvable:$true] %s49
      %55 = dma.hbm_to_vmem [thread:$0]  %s6, 512, %s50, [#allocation8], 128, 128, 8
    $region29: #{tpu_custom_call.1} parent=1 // pred_fallthru
      _
    // Predicated region
    $region30: #{tpu_custom_call.1} parent=1 // pred_check
      _
    $region31: #{tpu_custom_call.1} parent=1 // pred_check_branch
      %57 = sbr.rel (0) target = $region33
    $region32: #{tpu_custom_call.1} parent=1 // pred_region
      %s59 = ssub.s32 512, 512
      %60 = vsyncadd [#allocation8], %s59
      %s61 = sshll.u32 [#allocation9], 4
      %s62 = int_to_ptr.vmem [resolvable:$true] %s61
      %67 = dma.hbm_to_vmem [thread:$0]  %s7, 512, %s62, [#allocation8], 128, 128, 8
    $region33: #{tpu_custom_call.1} parent=1 // pred_fallthru
      _
    // Predicated region
    $region34: #{tpu_custom_call.1} parent=1 // pred_check
      _
    $region35: #{tpu_custom_call.1} parent=1 // pred_check_branch
      %69 = sbr.rel (0) target = $region37
    $region36: #{tpu_custom_call.1} parent=1 // pred_region
      %s71 = ssub.s32 16, 16
      %72 = vsyncadd [#allocation11], %s71
      %s74 = sshll.u32 [#allocation10], 4
      %s75 = int_to_ptr.vmem [resolvable:$true] %s74
      %77 = dma.hbm_to_vmem [thread:$0]  %s8, 16, %s75, [#allocation11]
    $region37: #{tpu_custom_call.1} parent=1 // pred_fallthru
      _
    // Predicated region
    $region38: #{tpu_custom_call.1} parent=1 // pred_check
      _
    $region39: #{tpu_custom_call.1} parent=1 // pred_check_branch
      %79 = sbr.rel (0) target = $region41
    $region40: #{tpu_custom_call.1} parent=1 // pred_region
      _
    $region41: #{tpu_custom_call.1} parent=1 // pred_fallthru
      _
    // Predicated region
    $region42: #{tpu_custom_call.1} parent=1 // pred_check
      _
    $region43: #{tpu_custom_call.1} parent=1 // pred_check_branch
      %81 = sbr.rel (0) target = $region45
    $region44: #{tpu_custom_call.1} parent=1 // pred_region
      _
    $region45: #{tpu_custom_call.1} parent=1 // pred_fallthru
      _
    // Predicated region
    $region46: #{tpu_custom_call.1} parent=1 // pred_check
      _
    $region47: #{tpu_custom_call.1} parent=1 // pred_check_branch
      %83 = sbr.rel (0) target = $region49
    $region48: #{tpu_custom_call.1} parent=1 // pred_region
      _
    $region49: #{tpu_custom_call.1} parent=1 // pred_fallthru
      _
    // Predicated region
    $region50: #{tpu_custom_call.1} parent=1 // pred_check
      _
    $region51: #{tpu_custom_call.1} parent=1 // pred_check_branch
      %85 = sbr.rel (0) target = $region53
    $region52: #{tpu_custom_call.1} parent=1 // pred_region
      _
    $region53: #{tpu_custom_call.1} parent=1 // pred_fallthru
      _
    // Predicated region
    $region54: #{tpu_custom_call.1} parent=1 // pred_check
      _
    $region55: #{tpu_custom_call.1} parent=1 // pred_check_branch
      %87 = sbr.rel (0) target = $region57
    $region56: #{tpu_custom_call.1} parent=1 // pred_region
      %88 = dma.done [#allocation5], 512
    $region57: #{tpu_custom_call.1} parent=1 // pred_fallthru
      _
    // Predicated region
    $region58: #{tpu_custom_call.1} parent=1 // pred_check
      _
    $region59: #{tpu_custom_call.1} parent=1 // pred_check_branch
      %90 = sbr.rel (0) target = $region61
    $region60: #{tpu_custom_call.1} parent=1 // pred_region
      %91 = dma.done [#allocation8], 512
    $region61: #{tpu_custom_call.1} parent=1 // pred_fallthru
      _
    // Predicated region
    $region62: #{tpu_custom_call.1} parent=1 // pred_check
      _
    $region63: #{tpu_custom_call.1} parent=1 // pred_check_branch
      %93 = sbr.rel (0) target = $region65
    $region64: #{tpu_custom_call.1} parent=1 // pred_region
      %94 = dma.done [#allocation8], 512
    $region65: #{tpu_custom_call.1} parent=1 // pred_fallthru
      _
    // Predicated region
    $region66: #{tpu_custom_call.1} parent=1 // pred_check
      _
    $region67: #{tpu_custom_call.1} parent=1 // pred_check_branch
      %96 = sbr.rel (0) target = $region69
    $region68: #{tpu_custom_call.1} parent=1 // pred_region
      %97 = dma.done [#allocation11], 16
    $region69: #{tpu_custom_call.1} parent=1 // pred_fallthru
      _
    %p98 = scmp.eq.s32.totalorder 0, 0
    // Predicated region
    $region70: #{tpu_custom_call.1} parent=1 // pred_check
      %p99 = pneg %p98
    $region71: #{tpu_custom_call.1} parent=1 // pred_check_branch
      %101 = sbr.rel (%p99) target = $region73
    $region72: #{tpu_custom_call.1} parent=1 // pred_region
      %vm102 = vcmask 261120
      %103 = vst.msk [vmem:[#allocation2] sm:$0xff] %vm102, 0.0
      %vm104 = vcmask 392192
      %105 = vst.msk [vmem:[#allocation3] sm:$0xff] %vm104, 0.0
    $region73: #{tpu_custom_call.1} parent=1 // pred_fallthru
      _
    %v106 = vld [vmem:[#allocation2] sm:$0xff]
    %v107 = vld [vmem:[%s0] sm:$0xff]
    %v108 = vld [vmem:[%s0 + $0x8] sm:$0xff]
    %v109 = vld [vmem:[%s0 + $0x10] sm:$0xff]
    %v110 = vld [vmem:[%s0 + $0x18] sm:$0xff]
    %v111 = vld [vmem:[%s0 + $0x20] sm:$0xff]
    %v112 = vld [vmem:[%s0 + $0x28] sm:$0xff]
    %v113 = vld [vmem:[%s0 + $0x30] sm:$0xff]
    %v114 = vld [vmem:[%s0 + $0x38] sm:$0xff]
    %vm115 = vcmask 261120
    %v116 = vsel %vm115, %v107, 0.0
    %v117 = vrot.slane %v116, 4
    %v118 = vadd.f32 %v116, %v117
    %v119 = vrot.slane %v118, 2
    %v120 = vadd.f32 %v118, %v119
    %v121 = vrot.slane %v120, 1
    %v122 = vadd.f32 %v120, %v121
    %v123 = vsel %vm115, %v108, 0.0
    %v124 = vrot.slane %v123, 4
    %v125 = vadd.f32 %v123, %v124
    %v126 = vrot.slane %v125, 2
    %v127 = vadd.f32 %v125, %v126
    %v128 = vrot.slane %v127, 1
    %v129 = vadd.f32 %v127, %v128
    %v130 = vsel %vm115, %v109, 0.0
    %v131 = vrot.slane %v130, 4
    %v132 = vadd.f32 %v130, %v131
    %v133 = vrot.slane %v132, 2
    %v134 = vadd.f32 %v132, %v133
    %v135 = vrot.slane %v134, 1
    %v136 = vadd.f32 %v134, %v135
    %v137 = vsel %vm115, %v110, 0.0
    %v138 = vrot.slane %v137, 4
    %v139 = vadd.f32 %v137, %v138
    %v140 = vrot.slane %v139, 2
    %v141 = vadd.f32 %v139, %v140
    %v142 = vrot.slane %v141, 1
    %v143 = vadd.f32 %v141, %v142
    %v144 = vsel %vm115, %v111, 0.0
    %v145 = vrot.slane %v144, 4
    %v146 = vadd.f32 %v144, %v145
    %v147 = vrot.slane %v146, 2
    %v148 = vadd.f32 %v146, %v147
    %v149 = vrot.slane %v148, 1
    %v150 = vadd.f32 %v148, %v149
    %v151 = vsel %vm115, %v112, 0.0
    %v152 = vrot.slane %v151, 4
    %v153 = vadd.f32 %v151, %v152
    %v154 = vrot.slane %v153, 2
    %v155 = vadd.f32 %v153, %v154
    %v156 = vrot.slane %v155, 1
    %v157 = vadd.f32 %v155, %v156
    %v158 = vsel %vm115, %v113, 0.0
    %v159 = vrot.slane %v158, 4
    %v160 = vadd.f32 %v158, %v159
    %v161 = vrot.slane %v160, 2
    %v162 = vadd.f32 %v160, %v161
    %v163 = vrot.slane %v162, 1
    %v164 = vadd.f32 %v162, %v163
    %v165 = vsel %vm115, %v114, 0.0
    %v166 = vrot.slane %v165, 4
    %v167 = vadd.f32 %v165, %v166
    %v168 = vrot.slane %v167, 2
    %v169 = vadd.f32 %v167, %v168
    %v170 = vrot.slane %v169, 1
    %v171 = vadd.f32 %v169, %v170
    %vm180 = vcmask 1041409
    %v181 = vsel %vm180, %v129, %v122
    %vm182 = vcmask 1042434
    %v183 = vsel %vm182, %v136, %v181
    %vm184 = vcmask 1043459
    %v185 = vsel %vm184, %v143, %v183
    %vm186 = vcmask 1044484
    %v187 = vsel %vm186, %v150, %v185
    %vm188 = vcmask 1045509
    %v189 = vsel %vm188, %v157, %v187
    %vm190 = vcmask 1046534
    %v191 = vsel %vm190, %v164, %v189
    %vm192 = vcmask 1047559
    %v193 = vsel %vm192, %v171, %v191
    %v195 = vadd.f32 %v106, %v193
    %196 = vst.msk [vmem:[#allocation2] sm:$0xff] %vm115, %v195
    %v197 = vld [vmem:[#allocation3] sm:$0xff]
    %v198 = vld [vmem:[%s1] sm:$0xff]
    %v199 = vld [vmem:[%s1 + $0x8] sm:$0xff]
    %v200 = vld [vmem:[%s1 + $0x10] sm:$0xff]
    %v201 = vld [vmem:[%s1 + $0x18] sm:$0xff]
    %v202 = vld [vmem:[%s1 + $0x20] sm:$0xff]
    %v203 = vld [vmem:[%s1 + $0x28] sm:$0xff]
    %v204 = vld [vmem:[%s1 + $0x30] sm:$0xff]
    %v205 = vld [vmem:[%s1 + $0x38] sm:$0xff]
    %vm206 = vcmask 392192
    %v207 = vsel %vm206, %v198, 0.0
    %v208 = vrot.slane %v207, 4
    %v209 = vadd.f32 %v207, %v208
    %v210 = vrot.slane %v209, 2
    %v211 = vadd.f32 %v209, %v210
    %v212 = vrot.slane %v211, 1
    %v213 = vadd.f32 %v211, %v212
    %v214 = vsel %vm206, %v199, 0.0
    %v215 = vrot.slane %v214, 4
    %v216 = vadd.f32 %v214, %v215
    %v217 = vrot.slane %v216, 2
    %v218 = vadd.f32 %v216, %v217
    %v219 = vrot.slane %v218, 1
    %v220 = vadd.f32 %v218, %v219
    %v221 = vsel %vm206, %v200, 0.0
    %v222 = vrot.slane %v221, 4
    %v223 = vadd.f32 %v221, %v222
    %v224 = vrot.slane %v223, 2
    %v225 = vadd.f32 %v223, %v224
    %v226 = vrot.slane %v225, 1
    %v227 = vadd.f32 %v225, %v226
    %v228 = vsel %vm206, %v201, 0.0
    %v229 = vrot.slane %v228, 4
    %v230 = vadd.f32 %v228, %v229
    %v231 = vrot.slane %v230, 2
    %v232 = vadd.f32 %v230, %v231
    %v233 = vrot.slane %v232, 1
    %v234 = vadd.f32 %v232, %v233
    %v235 = vsel %vm206, %v202, 0.0
    %v236 = vrot.slane %v235, 4
    %v237 = vadd.f32 %v235, %v236
    %v238 = vrot.slane %v237, 2
    %v239 = vadd.f32 %v237, %v238
    %v240 = vrot.slane %v239, 1
    %v241 = vadd.f32 %v239, %v240
    %v242 = vsel %vm206, %v203, 0.0
    %v243 = vrot.slane %v242, 4
    %v244 = vadd.f32 %v242, %v243
    %v245 = vrot.slane %v244, 2
    %v246 = vadd.f32 %v244, %v245
    %v247 = vrot.slane %v246, 1
    %v248 = vadd.f32 %v246, %v247
    %v249 = vsel %vm206, %v204, 0.0
    %v250 = vrot.slane %v249, 4
    %v251 = vadd.f32 %v249, %v250
    %v252 = vrot.slane %v251, 2
    %v253 = vadd.f32 %v251, %v252
    %v254 = vrot.slane %v253, 1
    %v255 = vadd.f32 %v253, %v254
    %v256 = vsel %vm206, %v205, 0.0
    %v257 = vrot.slane %v256, 4
    %v258 = vadd.f32 %v256, %v257
    %v259 = vrot.slane %v258, 2
    %v260 = vadd.f32 %v258, %v259
    %v261 = vrot.slane %v260, 1
    %v262 = vadd.f32 %v260, %v261
    %v271 = vsel %vm180, %v220, %v213
    %v272 = vsel %vm182, %v227, %v271
    %v273 = vsel %vm184, %v234, %v272
    %v274 = vsel %vm186, %v241, %v273
    %v275 = vsel %vm188, %v248, %v274
    %v276 = vsel %vm190, %v255, %v275
    %v277 = vsel %vm192, %v262, %v276
    %v279 = vadd.f32 %v197, %v277
    %280 = vst.msk [vmem:[#allocation3] sm:$0xff] %vm206, %v279
    // Predicated region
    $region74: #{tpu_custom_call.1} parent=1 // pred_check
      %p281 = pneg %p98
    $region75: #{tpu_custom_call.1} parent=1 // pred_check_branch
      %283 = sbr.rel (%p281) target = $region77
    $region76: #{tpu_custom_call.1} parent=1 // pred_region
      %v284 = vld [vmem:[#allocation2] sm:$0xff]
      %v285 = vmul.f32 %v284, 0.125
      %v286 = vld [vmem:[#allocation3] sm:$0xff]
      %v287 = vmul.f32 %v286, 0.125
      %v288 = vld [vmem:[#allocation4] sm:$0xff]
      %v289 = vld [vmem:[#allocation4 + $0x8] sm:$0xff]
      %v290 = vld [vmem:[#allocation4 + $0x10] sm:$0xff]
      %v291 = vld [vmem:[#allocation4 + $0x18] sm:$0xff]
      %v292 = vld [vmem:[%s3] sm:$0x1]
      %v294 = vlaneseq
      %v295 = vshrl.u32 %v294, 7
      %v296 = vsub.s32 0, %v295
      %v297 = vrot.slane %v292, %v296
      %v300 = vsel %vm115, %v285, 0
      %302 = vmatprep.subr.mxu0 0.0
      %303 = vmatpush1.msra.mxu0 %v288
      %304 = vmatprep.subr.mxu0 0.0
      %305 = vmatpush1.msra.mxu0 %v289
      %306 = vmatprep.subr.mxu0 0.0
      %307 = vmatpush1.msra.mxu0 %v290
      %308 = vmatprep.subr.mxu0 0.0
      %309 = vmatpush1.msra.mxu0 %v291
      %310 = vmatprep.subr.mxu0 0.0
      %311 = vmatpush1.msra.mxu0 0.0
      %312 = vmatprep.subr.mxu0 0.0
      %313 = vmatpush1.msra.mxu0 0.0
      %314 = vmatprep.subr.mxu0 0.0
      %315 = vmatpush1.msra.mxu0 0.0
      %316 = vmatprep.subr.mxu0 0.0
      %317 = vmatpush1.msra.mxu0 0.0
      %318 = vmatprep.subr.mxu0 0.0
      %319 = vmatpush1.msra.mxu0 0.0
      %320 = vmatprep.subr.mxu0 0.0
      %321 = vmatpush1.msra.mxu0 0.0
      %322 = vmatprep.subr.mxu0 0.0
      %323 = vmatpush1.msra.mxu0 0.0
      %324 = vmatprep.subr.mxu0 0.0
      %325 = vmatpush1.msra.mxu0 0.0
      %326 = vmatprep.subr.mxu0 0.0
      %327 = vmatpush1.msra.mxu0 0.0
      %328 = vmatprep.subr.mxu0 0.0
      %329 = vmatpush1.msra.mxu0 0.0
      %330 = vmatprep.subr.mxu0 0.0
      %331 = vmatpush1.msra.mxu0 0.0
      %332 = vmatprep.subr.mxu0 0.0
      %333 = vmatpush1.msra.mxu0 0.0
      %334 = vmatprep.subr.mxu0 0.0
      %335 = vmatpush1.msra.mxu0 0.0
      %336 = vmatprep.subr.mxu0 0.0
      %337 = vmatpush1.msra.mxu0 0.0
      %338 = vmatprep.subr.mxu0 0.0
      %339 = vmatpush1.msra.mxu0 0.0
      %340 = vmatprep.subr.mxu0 0.0
      %341 = vmatpush1.msra.mxu0 0.0
      %342 = vmatprep.subr.mxu0 0.0
      %343 = vmatpush1.msra.mxu0 0.0
      %344 = vmatprep.subr.mxu0 0.0
      %345 = vmatpush1.msra.mxu0 0.0
      %346 = vmatprep.subr.mxu0 0.0
      %347 = vmatpush1.msra.mxu0 0.0
      %348 = vmatprep.subr.mxu0 0.0
      %349 = vmatpush1.msra.mxu0 0.0
      %350 = vmatprep.subr.mxu0 0.0
      %351 = vmatpush1.msra.mxu0 0.0
      %352 = vmatprep.subr.mxu0 0.0
      %353 = vmatpush1.msra.mxu0 0.0
      %354 = vmatprep.subr.mxu0 0.0
      %355 = vmatpush1.msra.mxu0 0.0
      %356 = vmatprep.subr.mxu0 0.0
      %357 = vmatpush1.msra.mxu0 0.0
      %358 = vmatprep.subr.mxu0 0.0
      %359 = vmatpush1.msra.mxu0 0.0
      %360 = vmatprep.subr.mxu0 0.0
      %361 = vmatpush1.msra.mxu0 0.0
      %362 = vmatprep.subr.mxu0 0.0
      %363 = vmatpush1.msra.mxu0 0.0
      %364 = vmatprep.subr.mxu0 0.0
      %365 = vmatpush1.msra.mxu0 0.0
      %366 = vmatprep.mubr.f32.mxu0 0.0
      %367 = vmatmul.mubr.f32.gmra.mrb[0].mxu0 %v300
      %v368 = vpop.f32.mrb[0].mxu0
      %v369 = vadd.f32 %v297, %v368
      %v370 = vpop.f32.mrb[0].mxu0
      %371 = vdwg.mxu0
      %v372 = vld [vmem:[%s4] sm:$0xff]
      %v373 = vld [vmem:[%s4 + $0x8] sm:$0xff]
      %v374 = vld [vmem:[%s4 + $0x10] sm:$0xff]
      %v375 = vld [vmem:[%s4 + $0x18] sm:$0xff]
      %v376 = vld [vmem:[%s4 + $0x20] sm:$0xff]
      %v377 = vld [vmem:[%s4 + $0x28] sm:$0xff]
      %v378 = vld [vmem:[%s5] sm:$0x1]
      %v380 = vlaneseq
      %v381 = vshrl.u32 %v380, 7
      %v382 = vsub.s32 0, %v381
      %v383 = vrot.slane %v378, %v382
      %v386 = vsel %vm206, %v287, 0
      %388 = vmatprep.subr.mxu0 0.0
      %389 = vmatpush1.msra.mxu0 %v372
      %390 = vmatprep.subr.mxu0 0.0
      %391 = vmatpush1.msra.mxu0 %v373
      %392 = vmatprep.subr.mxu0 0.0
      %393 = vmatpush1.msra.mxu0 %v374
      %394 = vmatprep.subr.mxu0 0.0
      %395 = vmatpush1.msra.mxu0 %v375
      %396 = vmatprep.subr.mxu0 0.0
      %397 = vmatpush1.msra.mxu0 %v376
      %398 = vmatprep.subr.mxu0 0.0
      %399 = vmatpush1.msra.mxu0 %v377
      %400 = vmatprep.subr.mxu0 0.0
      %401 = vmatpush1.msra.mxu0 0.0
      %402 = vmatprep.subr.mxu0 0.0
      %403 = vmatpush1.msra.mxu0 0.0
      %404 = vmatprep.subr.mxu0 0.0
      %405 = vmatpush1.msra.mxu0 0.0
      %406 = vmatprep.subr.mxu0 0.0
      %407 = vmatpush1.msra.mxu0 0.0
      %408 = vmatprep.subr.mxu0 0.0
      %409 = vmatpush1.msra.mxu0 0.0
      %410 = vmatprep.subr.mxu0 0.0
      %411 = vmatpush1.msra.mxu0 0.0
      %412 = vmatprep.subr.mxu0 0.0
      %413 = vmatpush1.msra.mxu0 0.0
      %414 = vmatprep.subr.mxu0 0.0
      %415 = vmatpush1.msra.mxu0 0.0
      %416 = vmatprep.subr.mxu0 0.0
      %417 = vmatpush1.msra.mxu0 0.0
      %418 = vmatprep.subr.mxu0 0.0
      %419 = vmatpush1.msra.mxu0 0.0
      %420 = vmatprep.subr.mxu0 0.0
      %421 = vmatpush1.msra.mxu0 0.0
      %422 = vmatprep.subr.mxu0 0.0
      %423 = vmatpush1.msra.mxu0 0.0
      %424 = vmatprep.subr.mxu0 0.0
      %425 = vmatpush1.msra.mxu0 0.0
      %426 = vmatprep.subr.mxu0 0.0
      %427 = vmatpush1.msra.mxu0 0.0
      %428 = vmatprep.subr.mxu0 0.0
      %429 = vmatpush1.msra.mxu0 0.0
      %430 = vmatprep.subr.mxu0 0.0
      %431 = vmatpush1.msra.mxu0 0.0
      %432 = vmatprep.subr.mxu0 0.0
      %433 = vmatpush1.msra.mxu0 0.0
      %434 = vmatprep.subr.mxu0 0.0
      %435 = vmatpush1.msra.mxu0 0.0
      %436 = vmatprep.subr.mxu0 0.0
      %437 = vmatpush1.msra.mxu0 0.0
      %438 = vmatprep.subr.mxu0 0.0
      %439 = vmatpush1.msra.mxu0 0.0
      %440 = vmatprep.subr.mxu0 0.0
      %441 = vmatpush1.msra.mxu0 0.0
      %442 = vmatprep.subr.mxu0 0.0
      %443 = vmatpush1.msra.mxu0 0.0
      %444 = vmatprep.subr.mxu0 0.0
      %445 = vmatpush1.msra.mxu0 0.0
      %446 = vmatprep.subr.mxu0 0.0
      %447 = vmatpush1.msra.mxu0 0.0
      %448 = vmatprep.subr.mxu0 0.0
      %449 = vmatpush1.msra.mxu0 0.0
      %450 = vmatprep.subr.mxu0 0.0
      %451 = vmatpush1.msra.mxu0 0.0
      %452 = vmatprep.mubr.f32.mxu0 0.0
      %453 = vmatmul.mubr.f32.gmra.mrb[0].mxu0 %v386
      %v454 = vpop.f32.mrb[0].mxu0
      %v455 = vadd.f32 %v383, %v454
      %v456 = vpop.f32.mrb[0].mxu0
      %457 = vdwg.mxu0
      %v458 = vld [vmem:[#allocation7] sm:$0xff]
      %v459 = vld [vmem:[#allocation7 + $0x8] sm:$0xff]
      %v460 = vld [vmem:[#allocation7 + $0x10] sm:$0xff]
      %v461 = vld [vmem:[#allocation7 + $0x18] sm:$0xff]
      %v462 = vld [vmem:[#allocation9] sm:$0xff]
      %v463 = vld [vmem:[#allocation9 + $0x8] sm:$0xff]
      %v464 = vld [vmem:[#allocation9 + $0x10] sm:$0xff]
      %v465 = vld [vmem:[#allocation9 + $0x18] sm:$0xff]
      %v467 = vsel %vm115, %v455, 0
      %469 = vmatprep.subr.mxu0 0.0
      %470 = vmatpush1.msra.mxu0 %v462
      %471 = vmatprep.subr.mxu0 0.0
      %472 = vmatpush1.msra.mxu0 %v463
      %473 = vmatprep.subr.mxu0 0.0
      %474 = vmatpush1.msra.mxu0 %v464
      %475 = vmatprep.subr.mxu0 0.0
      %476 = vmatpush1.msra.mxu0 %v465
      %477 = vmatprep.subr.mxu0 0.0
      %478 = vmatpush1.msra.mxu0 0.0
      %479 = vmatprep.subr.mxu0 0.0
      %480 = vmatpush1.msra.mxu0 0.0
      %481 = vmatprep.subr.mxu0 0.0
      %482 = vmatpush1.msra.mxu0 0.0
      %483 = vmatprep.subr.mxu0 0.0
      %484 = vmatpush1.msra.mxu0 0.0
      %485 = vmatprep.subr.mxu0 0.0
      %486 = vmatpush1.msra.mxu0 0.0
      %487 = vmatprep.subr.mxu0 0.0
      %488 = vmatpush1.msra.mxu0 0.0
      %489 = vmatprep.subr.mxu0 0.0
      %490 = vmatpush1.msra.mxu0 0.0
      %491 = vmatprep.subr.mxu0 0.0
      %492 = vmatpush1.msra.mxu0 0.0
      %493 = vmatprep.subr.mxu0 0.0
      %494 = vmatpush1.msra.mxu0 0.0
      %495 = vmatprep.subr.mxu0 0.0
      %496 = vmatpush1.msra.mxu0 0.0
      %497 = vmatprep.subr.mxu0 0.0
      %498 = vmatpush1.msra.mxu0 0.0
      %499 = vmatprep.subr.mxu0 0.0
      %500 = vmatpush1.msra.mxu0 0.0
      %501 = vmatprep.subr.mxu0 0.0
      %502 = vmatpush1.msra.mxu0 0.0
      %503 = vmatprep.subr.mxu0 0.0
      %504 = vmatpush1.msra.mxu0 0.0
      %505 = vmatprep.subr.mxu0 0.0
      %506 = vmatpush1.msra.mxu0 0.0
      %507 = vmatprep.subr.mxu0 0.0
      %508 = vmatpush1.msra.mxu0 0.0
      %509 = vmatprep.subr.mxu0 0.0
      %510 = vmatpush1.msra.mxu0 0.0
      %511 = vmatprep.subr.mxu0 0.0
      %512 = vmatpush1.msra.mxu0 0.0
      %513 = vmatprep.subr.mxu0 0.0
      %514 = vmatpush1.msra.mxu0 0.0
      %515 = vmatprep.subr.mxu0 0.0
      %516 = vmatpush1.msra.mxu0 0.0
      %517 = vmatprep.subr.mxu0 0.0
      %518 = vmatpush1.msra.mxu0 0.0
      %519 = vmatprep.subr.mxu0 0.0
      %520 = vmatpush1.msra.mxu0 0.0
      %521 = vmatprep.subr.mxu0 0.0
      %522 = vmatpush1.msra.mxu0 0.0
      %523 = vmatprep.subr.mxu0 0.0
      %524 = vmatpush1.msra.mxu0 0.0
      %525 = vmatprep.subr.mxu0 0.0
      %526 = vmatpush1.msra.mxu0 0.0
      %527 = vmatprep.subr.mxu0 0.0
      %528 = vmatpush1.msra.mxu0 0.0
      %529 = vmatprep.subr.mxu0 0.0
      %530 = vmatpush1.msra.mxu0 0.0
      %531 = vmatprep.subr.mxu0 0.0
      %532 = vmatpush1.msra.mxu0 0.0
      %533 = vmatprep.mubr.f32.mxu0 0.0
      %534 = vmatmul.mubr.f32.gmra.mrb[0].mxu0 %v467
      %v535 = vpop.f32.mrb[0].mxu0
      %v536 = vadd.f32 0.0, %v535
      %v537 = vpop.f32.mrb[0].mxu0
      %538 = vdwg.mxu0
      %v540 = vsel %vm115, %v369, 0
      %542 = vmatprep.subr.mxu0 0.0
      %543 = vmatpush1.msra.mxu0 %v458
      %544 = vmatprep.subr.mxu0 0.0
      %545 = vmatpush1.msra.mxu0 %v459
      %546 = vmatprep.subr.mxu0 0.0
      %547 = vmatpush1.msra.mxu0 %v460
      %548 = vmatprep.subr.mxu0 0.0
      %549 = vmatpush1.msra.mxu0 %v461
      %550 = vmatprep.subr.mxu0 0.0
      %551 = vmatpush1.msra.mxu0 0.0
      %552 = vmatprep.subr.mxu0 0.0
      %553 = vmatpush1.msra.mxu0 0.0
      %554 = vmatprep.subr.mxu0 0.0
      %555 = vmatpush1.msra.mxu0 0.0
      %556 = vmatprep.subr.mxu0 0.0
      %557 = vmatpush1.msra.mxu0 0.0
      %558 = vmatprep.subr.mxu0 0.0
      %559 = vmatpush1.msra.mxu0 0.0
      %560 = vmatprep.subr.mxu0 0.0
      %561 = vmatpush1.msra.mxu0 0.0
      %562 = vmatprep.subr.mxu0 0.0
      %563 = vmatpush1.msra.mxu0 0.0
      %564 = vmatprep.subr.mxu0 0.0
      %565 = vmatpush1.msra.mxu0 0.0
      %566 = vmatprep.subr.mxu0 0.0
      %567 = vmatpush1.msra.mxu0 0.0
      %568 = vmatprep.subr.mxu0 0.0
      %569 = vmatpush1.msra.mxu0 0.0
      %570 = vmatprep.subr.mxu0 0.0
      %571 = vmatpush1.msra.mxu0 0.0
      %572 = vmatprep.subr.mxu0 0.0
      %573 = vmatpush1.msra.mxu0 0.0
      %574 = vmatprep.subr.mxu0 0.0
      %575 = vmatpush1.msra.mxu0 0.0
      %576 = vmatprep.subr.mxu0 0.0
      %577 = vmatpush1.msra.mxu0 0.0
      %578 = vmatprep.subr.mxu0 0.0
      %579 = vmatpush1.msra.mxu0 0.0
      %580 = vmatprep.subr.mxu0 0.0
      %581 = vmatpush1.msra.mxu0 0.0
      %582 = vmatprep.subr.mxu0 0.0
      %583 = vmatpush1.msra.mxu0 0.0
      %584 = vmatprep.subr.mxu0 0.0
      %585 = vmatpush1.msra.mxu0 0.0
      %586 = vmatprep.subr.mxu0 0.0
      %587 = vmatpush1.msra.mxu0 0.0
      %588 = vmatprep.subr.mxu0 0.0
      %589 = vmatpush1.msra.mxu0 0.0
      %590 = vmatprep.subr.mxu0 0.0
      %591 = vmatpush1.msra.mxu0 0.0
      %592 = vmatprep.subr.mxu0 0.0
      %593 = vmatpush1.msra.mxu0 0.0
      %594 = vmatprep.subr.mxu0 0.0
      %595 = vmatpush1.msra.mxu0 0.0
      %596 = vmatprep.subr.mxu0 0.0
      %597 = vmatpush1.msra.mxu0 0.0
      %598 = vmatprep.subr.mxu0 0.0
      %599 = vmatpush1.msra.mxu0 0.0
      %600 = vmatprep.subr.mxu0 0.0
      %601 = vmatpush1.msra.mxu0 0.0
      %602 = vmatprep.subr.mxu0 0.0
      %603 = vmatpush1.msra.mxu0 0.0
      %604 = vmatprep.subr.mxu0 0.0
      %605 = vmatpush1.msra.mxu0 0.0
      %606 = vmatprep.mubr.f32.mxu0 0.0
      %607 = vmatmul.mubr.f32.gmra.mrb[0].mxu0 %v540
      %v608 = vpop.f32.mrb[0].mxu0
      %v609 = vadd.f32 %v536, %v608
      %v610 = vpop.f32.mrb[0].mxu0
      %611 = vdwg.mxu0
      %v612 = vld [vmem:[#allocation10] sm:$0x1]
      %v614 = vlaneseq
      %v615 = vshrl.u32 %v614, 7
      %v616 = vsub.s32 0, %v615
      %v617 = vrot.slane %v612, %v616
      %v619 = vadd.f32 %v609, %v617
      %v620 = vmax.f32 %v619, 0.0
      %v621 = vld [vmem:[%s9] sm:$0xff]
      %v622 = vld [vmem:[%s9 + $0x8] sm:$0xff]
      %v623 = vld [vmem:[%s9 + $0x10] sm:$0xff]
      %v624 = vld [vmem:[%s9 + $0x18] sm:$0xff]
      %v625 = vld [vmem:[%s10] sm:$0x1]
      %v627 = vlaneseq
      %v628 = vshrl.u32 %v627, 7
      %v629 = vsub.s32 0, %v628
      %v630 = vrot.slane %v625, %v629
      %v633 = vsel %vm115, %v620, 0
      %635 = vmatprep.subr.mxu0 0.0
      %636 = vmatpush1.msra.mxu0 %v621
      %637 = vmatprep.subr.mxu0 0.0
      %638 = vmatpush1.msra.mxu0 %v622
      %639 = vmatprep.subr.mxu0 0.0
      %640 = vmatpush1.msra.mxu0 %v623
      %641 = vmatprep.subr.mxu0 0.0
      %642 = vmatpush1.msra.mxu0 %v624
      %643 = vmatprep.subr.mxu0 0.0
      %644 = vmatpush1.msra.mxu0 0.0
      %645 = vmatprep.subr.mxu0 0.0
      %646 = vmatpush1.msra.mxu0 0.0
      %647 = vmatprep.subr.mxu0 0.0
      %648 = vmatpush1.msra.mxu0 0.0
      %649 = vmatprep.subr.mxu0 0.0
      %650 = vmatpush1.msra.mxu0 0.0
      %651 = vmatprep.subr.mxu0 0.0
      %652 = vmatpush1.msra.mxu0 0.0
      %653 = vmatprep.subr.mxu0 0.0
      %654 = vmatpush1.msra.mxu0 0.0
      %655 = vmatprep.subr.mxu0 0.0
      %656 = vmatpush1.msra.mxu0 0.0
      %657 = vmatprep.subr.mxu0 0.0
      %658 = vmatpush1.msra.mxu0 0.0
      %659 = vmatprep.subr.mxu0 0.0
      %660 = vmatpush1.msra.mxu0 0.0
      %661 = vmatprep.subr.mxu0 0.0
      %662 = vmatpush1.msra.mxu0 0.0
      %663 = vmatprep.subr.mxu0 0.0
      %664 = vmatpush1.msra.mxu0 0.0
      %665 = vmatprep.subr.mxu0 0.0
      %666 = vmatpush1.msra.mxu0 0.0
      %667 = vmatprep.subr.mxu0 0.0
      %668 = vmatpush1.msra.mxu0 0.0
      %669 = vmatprep.subr.mxu0 0.0
      %670 = vmatpush1.msra.mxu0 0.0
      %671 = vmatprep.subr.mxu0 0.0
      %672 = vmatpush1.msra.mxu0 0.0
      %673 = vmatprep.subr.mxu0 0.0
      %674 = vmatpush1.msra.mxu0 0.0
      %675 = vmatprep.subr.mxu0 0.0
      %676 = vmatpush1.msra.mxu0 0.0
      %677 = vmatprep.subr.mxu0 0.0
      %678 = vmatpush1.msra.mxu0 0.0
      %679 = vmatprep.subr.mxu0 0.0
      %680 = vmatpush1.msra.mxu0 0.0
      %681 = vmatprep.subr.mxu0 0.0
      %682 = vmatpush1.msra.mxu0 0.0
      %683 = vmatprep.subr.mxu0 0.0
      %684 = vmatpush1.msra.mxu0 0.0
      %685 = vmatprep.subr.mxu0 0.0
      %686 = vmatpush1.msra.mxu0 0.0
      %687 = vmatprep.subr.mxu0 0.0
      %688 = vmatpush1.msra.mxu0 0.0
      %689 = vmatprep.subr.mxu0 0.0
      %690 = vmatpush1.msra.mxu0 0.0
      %691 = vmatprep.subr.mxu0 0.0
      %692 = vmatpush1.msra.mxu0 0.0
      %693 = vmatprep.subr.mxu0 0.0
      %694 = vmatpush1.msra.mxu0 0.0
      %695 = vmatprep.subr.mxu0 0.0
      %696 = vmatpush1.msra.mxu0 0.0
      %697 = vmatprep.subr.mxu0 0.0
      %698 = vmatpush1.msra.mxu0 0.0
      %699 = vmatprep.mubr.f32.mxu0 0.0
      %700 = vmatmul.mubr.f32.gmra.mrb[0].mxu0 %v633
      %v701 = vpop.f32.mrb[0].mxu0
      %v702 = vadd.f32 %v630, %v701
      %v703 = vpop.f32.mrb[0].mxu0
      %704 = vdwg.mxu0
      %v705 = vmax.f32 %v702, 0.0
      %v706 = vld [vmem:[%s11] sm:$0xff]
      %v707 = vld [vmem:[%s11 + $0x8] sm:$0xff]
      %v708 = vld [vmem:[%s12] sm:$0x1]
      %v710 = vlaneseq
      %v711 = vshrl.u32 %v710, 7
      %v712 = vsub.s32 0, %v711
      %v713 = vrot.slane %v708, %v712
      %vm715 = vcmask 130048
      %v717 = vsel %vm715, %v705, 0
      %719 = vmatprep.subr.mxu0 0.0
      %720 = vmatpush1.msra.mxu0 %v706
      %721 = vmatprep.subr.mxu0 0.0
      %722 = vmatpush1.msra.mxu0 %v707
      %723 = vmatprep.subr.mxu0 0.0
      %724 = vmatpush1.msra.mxu0 0.0
      %725 = vmatprep.subr.mxu0 0.0
      %726 = vmatpush1.msra.mxu0 0.0
      %727 = vmatprep.subr.mxu0 0.0
      %728 = vmatpush1.msra.mxu0 0.0
      %729 = vmatprep.subr.mxu0 0.0
      %730 = vmatpush1.msra.mxu0 0.0
      %731 = vmatprep.subr.mxu0 0.0
      %732 = vmatpush1.msra.mxu0 0.0
      %733 = vmatprep.subr.mxu0 0.0
      %734 = vmatpush1.msra.mxu0 0.0
      %735 = vmatprep.subr.mxu0 0.0
      %736 = vmatpush1.msra.mxu0 0.0
      %737 = vmatprep.subr.mxu0 0.0
      %738 = vmatpush1.msra.mxu0 0.0
      %739 = vmatprep.subr.mxu0 0.0
      %740 = vmatpush1.msra.mxu0 0.0
      %741 = vmatprep.subr.mxu0 0.0
      %742 = vmatpush1.msra.mxu0 0.0
      %743 = vmatprep.subr.mxu0 0.0
      %744 = vmatpush1.msra.mxu0 0.0
      %745 = vmatprep.subr.mxu0 0.0
      %746 = vmatpush1.msra.mxu0 0.0
      %747 = vmatprep.subr.mxu0 0.0
      %748 = vmatpush1.msra.mxu0 0.0
      %749 = vmatprep.subr.mxu0 0.0
      %750 = vmatpush1.msra.mxu0 0.0
      %751 = vmatprep.subr.mxu0 0.0
      %752 = vmatpush1.msra.mxu0 0.0
      %753 = vmatprep.subr.mxu0 0.0
      %754 = vmatpush1.msra.mxu0 0.0
      %755 = vmatprep.subr.mxu0 0.0
      %756 = vmatpush1.msra.mxu0 0.0
      %757 = vmatprep.subr.mxu0 0.0
      %758 = vmatpush1.msra.mxu0 0.0
      %759 = vmatprep.subr.mxu0 0.0
      %760 = vmatpush1.msra.mxu0 0.0
      %761 = vmatprep.subr.mxu0 0.0
      %762 = vmatpush1.msra.mxu0 0.0
      %763 = vmatprep.subr.mxu0 0.0
      %764 = vmatpush1.msra.mxu0 0.0
      %765 = vmatprep.subr.mxu0 0.0
      %766 = vmatpush1.msra.mxu0 0.0
      %767 = vmatprep.subr.mxu0 0.0
      %768 = vmatpush1.msra.mxu0 0.0
      %769 = vmatprep.subr.mxu0 0.0
      %770 = vmatpush1.msra.mxu0 0.0
      %771 = vmatprep.subr.mxu0 0.0
      %772 = vmatpush1.msra.mxu0 0.0
      %773 = vmatprep.subr.mxu0 0.0
      %774 = vmatpush1.msra.mxu0 0.0
      %775 = vmatprep.subr.mxu0 0.0
      %776 = vmatpush1.msra.mxu0 0.0
      %777 = vmatprep.subr.mxu0 0.0
      %778 = vmatpush1.msra.mxu0 0.0
      %779 = vmatprep.subr.mxu0 0.0
      %780 = vmatpush1.msra.mxu0 0.0
      %781 = vmatprep.subr.mxu0 0.0
      %782 = vmatpush1.msra.mxu0 0.0
      %783 = vmatprep.mubr.f32.mxu0 0.0
      %784 = vmatmul.mubr.f32.gmra.mrb[0].mxu0 %v717
      %v785 = vpop.f32.mrb[0].mxu0
      %v786 = vadd.f32 %v713, %v785
      %v787 = vpop.f32.mrb[0].mxu0
      %788 = vdwg.mxu0
      %789 = vst [vmem:[#allocation12] sm:$0xff] %v786
    $region77: #{tpu_custom_call.1} parent=1 // pred_fallthru
      _
    // Predicated region
    $region78: #{tpu_custom_call.1} parent=1 // pred_check
      _
    $region79: #{tpu_custom_call.1} parent=1 // pred_check_branch
      %791 = sbr.rel (0) target = $region81
    $region80: #{tpu_custom_call.1} parent=1 // pred_region
      %s793 = ssub.s32 128, 128
      %794 = vsyncadd [#allocation6], %s793
      %s796 = sshll.u32 [#allocation12], 4
      %s797 = int_to_ptr.vmem [resolvable:$true] %s796
      %799 = dma.vmem_to_hbm [thread:$0]  %s797, 128, %s13, [#allocation6]
    $region81: #{tpu_custom_call.1} parent=1 // pred_fallthru
      _
    // Predicated region
    $region82: #{tpu_custom_call.1} parent=1 // pred_check
      _
    $region83: #{tpu_custom_call.1} parent=1 // pred_check_branch
      %801 = sbr.rel (0) target = $region85
    $region84: #{tpu_custom_call.1} parent=1 // pred_region
      %802 = dma.done [#allocation6], 128
    $region85: #{tpu_custom_call.1} parent=1 // pred_fallthru
      _
    %803 = vsyncpa [#allocation5], 1
    %804 = vsyncpa [#allocation8], 1
    %805 = vsyncpa [#allocation11], 1
    %806 = vsyncpa [#allocation6], 1

</llo_original>
